<compile_context>
chip_gen: v5e
topology: v5e:2x2
jax: 0.10.0
libtpu: 0.0.40
codegen_flags: <defaults>
</compile_context>

<pallas_src>
import functools

import jax
import jax.numpy as jnp
from jax.experimental import pallas as pl
from jax.experimental.pallas import tpu as pltpu


# ---------------------------------------------------------------------------
# Kernel A (fast path, no attention-score output): flash-style attention.
# grid = (B, n_q, n_kv); online softmax over the KV axis with f32 VMEM scratch;
# the output projection Wo is fused at the last KV step via per-head accumulation.
# ---------------------------------------------------------------------------
def _mha_flash_kernel(q_ref, k_ref, v_ref, wo_ref, out_ref,
                      m_sc, l_sc, acc_sc, *, n_head):
    kv = pl.program_id(2)

    @pl.when(kv == 0)
    def _():
        m_sc[...] = jnp.full(m_sc.shape, -jnp.inf, m_sc.dtype)
        l_sc[...] = jnp.zeros(l_sc.shape, l_sc.dtype)
        acc_sc[...] = jnp.zeros(acc_sc.shape, acc_sc.dtype)

    q = q_ref[0]                               # (n_head, tq,  D)  (scale folded into Wq)
    k = k_ref[0]                               # (n_head, tkv, D)
    v = v_ref[0]                               # (n_head, tkv, D)

    # All heads in one batched MXU call.
    s = jnp.einsum('hqd,hkd->hqk', q, k,
                   preferred_element_type=jnp.float32)          # (n_head, tq, tkv) f32

    m_prev = m_sc[...]
    m_new = jnp.maximum(m_prev, jnp.max(s, axis=-1, keepdims=True))
    alpha = jnp.exp(m_prev - m_new)                              # (n_head, tq, 1)
    p = jnp.exp(s - m_new)                                       # (n_head, tq, tkv)
    l_sc[...] = alpha * l_sc[...] + jnp.sum(p, axis=-1, keepdims=True)
    acc_sc[...] = alpha * acc_sc[...] + jnp.einsum(
        'hqk,hkd->hqd', p.astype(v.dtype), v,
        preferred_element_type=jnp.float32)
    m_sc[...] = m_new

    @pl.when(kv == pl.num_programs(2) - 1)
    def _():
        inv_l = pl.reciprocal(l_sc[...], approx=True)            # EUP, off the VALU path
        normed = acc_sc[...] * inv_l                             # (n_head, tq, D) f32
        # Fused output projection: per-head accumulation instead of a lane-concat.
        out = jnp.dot(normed[0].astype(wo_ref.dtype), wo_ref[0],
                      preferred_element_type=jnp.float32)
        for h in range(1, n_head):
            out = out + jnp.dot(normed[h].astype(wo_ref.dtype), wo_ref[h],
                                preferred_element_type=jnp.float32)
        out_ref[0] = out.astype(out_ref.dtype)


# ---------------------------------------------------------------------------
# Kernel B (module-faithful path): also emits the per-head softmax scores.
# grid = (B, n_q); full-sequence K/V per step (the scores must be materialized anyway).
# ---------------------------------------------------------------------------
def _mha_attn_kernel(q_ref, k_ref, v_ref, wo_ref, out_ref, attn_ref, *, n_head):
    q = q_ref[0]                               # (n_head, tq, D)
    k = k_ref[0]                               # (n_head, S,  D)
    v = v_ref[0]                               # (n_head, S,  D)

    s = jnp.einsum('hqd,hkd->hqk', q, k,
                   preferred_element_type=jnp.float32)          # (n_head, tq, S)
    s = s - jnp.max(s, axis=-1, keepdims=True)
    e = jnp.exp(s)
    attn = e * pl.reciprocal(jnp.sum(e, axis=-1, keepdims=True), approx=True)
    attn_ref[0] = attn.astype(attn_ref.dtype)

    pv = jnp.einsum('hqk,hkd->hqd', attn.astype(v.dtype), v,
                    preferred_element_type=jnp.float32)          # (n_head, tq, D)
    out = jnp.dot(pv[0].astype(wo_ref.dtype), wo_ref[0],
                  preferred_element_type=jnp.float32)
    for h in range(1, n_head):
        out = out + jnp.dot(pv[h].astype(wo_ref.dtype), wo_ref[h],
                            preferred_element_type=jnp.float32)
    out_ref[0] = out.astype(out_ref.dtype)


def _pick_tile(total, cap):
    """Largest divisor of `total` that is <= cap and a multiple of 8; else `total`."""
    if total <= cap:
        return total
    for t in range(cap, 7, -1):
        if total % t == 0 and t % 8 == 0:
            return t
    return total


def multi_head_attention(query, key, value, wq, wk, wv, wo, *,
                         q_tile=256, kv_tile=512, return_attention=True):
    """
    query/key/value : (B, S, H)
    wq, wk, wv      : (n_head, H, D)  pre-transposed so x @ w == nn.Linear(x)
    wo              : (H, H)          pre-transposed so x @ wo == o_w(x)
    Returns (output, attention):
      output    : (B, S, H)
      attention : (B, n_head, S, S) softmax scores, or None if return_attention=False.
    Dropout layers of the PyTorch module are identity (inference semantics).
    """
    B, S, H = query.shape
    n_head, _, D = wq.shape
    assert n_head * D == H
    dtype = query.dtype
    itemsize = jnp.dtype(dtype).itemsize

    # ---- wrapper-side weight packing + projections (computed ONCE, not per q-tile) ----
    scale = 1.0 / jnp.sqrt(jnp.float32(D))
    wq_all = (jnp.transpose(wq, (1, 0, 2)).reshape(H, H).astype(jnp.float32)
              * scale).astype(dtype)                              # scale folded into Wq
    wk_all = jnp.transpose(wk, (1, 0, 2)).reshape(H, H).astype(dtype)
    wv_all = jnp.transpose(wv, (1, 0, 2)).reshape(H, H).astype(dtype)
    wo3 = wo.reshape(n_head, D, H).astype(dtype)                  # head-major slabs of Wo

    def project(x, w):
        p = jnp.einsum('bsh,hf->bsf', x.astype(dtype), w, precision='highest')
        return p.reshape(B, S, n_head, D).transpose(0, 2, 1, 3)   # (B, n_head, S, D)

    q_heads = project(query, wq_all)
    k_heads = project(key, wk_all)
    v_heads = project(value, wv_all)

    tq = _pick_tile(S, q_tile)
    n_q = S // tq

    if return_attention:
        kernel = functools.partial(_mha_attn_kernel, n_head=n_head)

        block_bytes = itemsize * (n_head * tq * D + 2 * n_head * S * D
                                  + n_head * D * H + tq * H + n_head * tq * S)
        temp_bytes = 4 * (3 * n_head * tq * S + 2 * n_head * tq * D + 2 * tq * H)
        need = 2 * block_bytes + temp_bytes
        vmem_limit = int(min(max(2 * need, 32 * 1024 * 1024), 127 * 1024 * 1024))

        cost = pl.CostEstimate(
            flops=int(4 * B * n_head * S * S * D + 2 * B * S * H * H),
            transcendentals=int(B * n_head * S * S),
            bytes_accessed=int(itemsize * (B * S * H * (2 + 2 * n_q)
                                           + n_head * D * H + B * n_head * S * S)))

        output, attn = pl.pallas_call(
            kernel,
            out_shape=(jax.ShapeDtypeStruct((B, S, H), dtype),
                       jax.ShapeDtypeStruct((B, n_head, S, S), dtype)),
            grid_spec=pltpu.PrefetchScalarGridSpec(
                num_scalar_prefetch=0,
                grid=(B, n_q),
                in_specs=[
                    pl.BlockSpec((1, n_head, tq, D), lambda b, qi: (b, 0, qi, 0)),
                    pl.BlockSpec((1, n_head, S, D), lambda b, qi: (b, 0, 0, 0)),
                    pl.BlockSpec((1, n_head, S, D), lambda b, qi: (b, 0, 0, 0)),
                    pl.BlockSpec((n_head, D, H), lambda b, qi: (0, 0, 0)),
                ],
                out_specs=[
                    pl.BlockSpec((1, tq, H), lambda b, qi: (b, qi, 0)),
                    pl.BlockSpec((1, n_head, tq, S), lambda b, qi: (b, 0, qi, 0)),
                ],
            ),
            compiler_params=pltpu.CompilerParams(
                dimension_semantics=("parallel", "parallel"),
                vmem_limit_bytes=vmem_limit),
            cost_estimate=cost,
        )(q_heads, k_heads, v_heads, wo3)
        return output, attn

    # ---- fast path: flash-style KV tiling, no attention-score output ----
    tkv = _pick_tile(S, kv_tile)
    n_kv = S // tkv
    kernel = functools.partial(_mha_flash_kernel, n_head=n_head)

    block_bytes = itemsize * (n_head * tq * D + 2 * n_head * tkv * D
                              + n_head * D * H + tq * H)
    scratch_bytes = 4 * n_head * tq * (2 + D)
    temp_bytes = 4 * (3 * n_head * tq * tkv + 2 * n_head * tq * D + 2 * tq * H)
    need = 2 * block_bytes + scratch_bytes + temp_bytes
    vmem_limit = int(min(max(2 * need, 32 * 1024 * 1024), 127 * 1024 * 1024))

    cost = pl.CostEstimate(
        flops=int(4 * B * n_head * S * S * D + 2 * B * S * H * H),
        transcendentals=int(B * n_head * S * S),
        bytes_accessed=int(itemsize * (B * S * H * (2 + 2 * n_q) + n_head * D * H)))

    output = pl.pallas_call(
        kernel,
        out_shape=jax.ShapeDtypeStruct((B, S, H), dtype),
        grid_spec=pltpu.PrefetchScalarGridSpec(
            num_scalar_prefetch=0,
            grid=(B, n_q, n_kv),
            in_specs=[
                pl.BlockSpec((1, n_head, tq, D), lambda b, qi, ki: (b, 0, qi, 0)),
                pl.BlockSpec((1, n_head, tkv, D), lambda b, qi, ki: (b, 0, ki, 0)),
                pl.BlockSpec((1, n_head, tkv, D), lambda b, qi, ki: (b, 0, ki, 0)),
                pl.BlockSpec((n_head, D, H), lambda b, qi, ki: (0, 0, 0)),
            ],
            out_specs=pl.BlockSpec((1, tq, H), lambda b, qi, ki: (b, qi, 0)),
            scratch_shapes=[
                pltpu.VMEM((n_head, tq, 1), jnp.float32),   # running max  m
                pltpu.VMEM((n_head, tq, 1), jnp.float32),   # running sum  l
                pltpu.VMEM((n_head, tq, D), jnp.float32),   # output accumulator
            ],
        ),
        compiler_params=pltpu.CompilerParams(
            dimension_semantics=("parallel", "parallel", "arbitrary"),
            vmem_limit_bytes=vmem_limit),
        cost_estimate=cost,
    )(q_heads, k_heads, v_heads, wo3)
    return output, None


def _reference(query, key, value, wq, wk, wv, wo):
    """Plain-JAX reference of the PyTorch forward (dropout = identity)."""
    n_head, _, D = wq.shape
    outs, attns = [], []
    for h in range(n_head):
        q = jnp.einsum('bsh,hd->bsd', query, wq[h], precision='highest')
        k = jnp.einsum('bsh,hd->bsd', key, wk[h], precision='highest')
        v = jnp.einsum('bsh,hd->bsd', value, wv[h], precision='highest')
        s = jnp.einsum('bqd,bkd->bqk', q, k, precision='highest') / jnp.sqrt(jnp.float32(D))
        a = jax.nn.softmax(s, axis=-1)
        outs.append(jnp.einsum('bqk,bkd->bqd', a, v, precision='highest'))
        attns.append(a)
    concat = jnp.concatenate(outs, axis=-1)
    out = jnp.einsum('bsh,hf->bsf', concat, wo, precision='highest')
    return out, jnp.stack(attns, axis=1)   # (B, n_head, S, S)


if __name__ == "__main__":
    def make_inputs(B, S, H, n_head, seed=0):
        D = H // n_head
        key = jax.random.PRNGKey(seed)
        ks = jax.random.split(key, 7)
        query = jax.random.normal(ks[0], (B, S, H), dtype=jnp.float32)
        key_in = jax.random.normal(ks[1], (B, S, H), dtype=jnp.float32)
        value = jax.random.normal(ks[2], (B, S, H), dtype=jnp.float32)
        wq = jax.random.normal(ks[3], (n_head, H, D), dtype=jnp.float32) * 0.1
        wk = jax.random.normal(ks[4], (n_head, H, D), dtype=jnp.float32) * 0.1
        wv = jax.random.normal(ks[5], (n_head, H, D), dtype=jnp.float32) * 0.1
        wo = jax.random.normal(ks[6], (H, H), dtype=jnp.float32) * 0.1
        return query, key_in, value, wq, wk, wv, wo

    # Case 1: module-default tiny shapes (hidden_dim=32, n_head=4, seq=8, batch=2).
    # Case 2: multi-tile shapes exercising q-tiling and the online-softmax KV loop.
    for (B, S, H, n_head, q_tile, kv_tile) in [(2, 8, 32, 4, 256, 512),
                                               (2, 256, 64, 4, 128, 128)]:
        args = make_inputs(B, S, H, n_head)
        ref_out, ref_attn = _reference(*args)

        out, attn = multi_head_attention(*args, q_tile=q_tile, kv_tile=kv_tile,
                                         return_attention=True)
        out = jax.block_until_ready(out)
        attn = jax.block_until_ready(attn)
        assert out.shape == (B, S, H)
        assert attn.shape == (B, n_head, S, S)
        assert jnp.allclose(out, ref_out, atol=2e-3, rtol=2e-3), "output mismatch (attn path)"
        assert jnp.allclose(attn, ref_attn, atol=2e-3, rtol=2e-3), "attn mismatch"

        out_f, attn_f = multi_head_attention(*args, q_tile=q_tile, kv_tile=kv_tile,
                                             return_attention=False)
        out_f = jax.block_until_ready(out_f)
        assert attn_f is None
        assert jnp.allclose(out_f, ref_out, atol=2e-3, rtol=2e-3), "output mismatch (flash path)"

    # bf16 operand path (v6e/v7x throughput mode; f32 accumulation inside the kernel).
    args = make_inputs(2, 8, 32, 4)
    ref_out, ref_attn = _reference(*args)
    bf_args = [a.astype(jnp.bfloat16) for a in args]
    out_bf, attn_bf = multi_head_attention(*bf_args, return_attention=True)
    out_bf = jax.block_until_ready(out_bf)
    attn_bf = jax.block_until_ready(attn_bf)
    assert jnp.allclose(out_bf.astype(jnp.float32), ref_out, atol=1e-1, rtol=1e-1)
    assert jnp.allclose(attn_bf.astype(jnp.float32), ref_attn, atol=1e-1, rtol=1e-1)

    out_bff, _ = multi_head_attention(*bf_args, return_attention=False)
    out_bff = jax.block_until_ready(out_bff)
    assert jnp.allclose(out_bff.astype(jnp.float32), ref_out, atol=1e-1, rtol=1e-1)

    print("KERNEL_OK")
</pallas_src>

<mosaic_0001>
module attributes {stable_mosaic.version = 11 : i64} {
  func.func @_mha_attn_kernel(%arg0: i32, %arg1: i32, %arg2: memref<1x4x8x8xf32, #tpu.memory_space<vmem>>, %arg3: memref<1x4x8x8xf32, #tpu.memory_space<vmem>>, %arg4: memref<1x4x8x8xf32, #tpu.memory_space<vmem>>, %arg5: memref<4x8x32xf32, #tpu.memory_space<vmem>>, %arg6: memref<1x8x32xf32, #tpu.memory_space<vmem>>, %arg7: memref<1x4x8x8xf32, #tpu.memory_space<vmem>>) attributes {dimension_semantics = [#tpu.dimension_semantics<parallel>, #tpu.dimension_semantics<parallel>], iteration_bounds = array<i64: 2, 1>, scalar_prefetch = 0 : i64, scratch_operands = 0 : i64, tpu.core_type = #tpu.core_type<tc>, window_params = [{transform_indices = @transform_0, window_bounds = array<i64: 1, 4, 8, 8>}, {transform_indices = @transform_1, window_bounds = array<i64: 1, 4, 8, 8>}, {transform_indices = @transform_2, window_bounds = array<i64: 1, 4, 8, 8>}, {pipeline_mode = #tpu.pipeline_mode<synchronous>, transform_indices = @transform_3, window_bounds = array<i64: 4, 8, 32>}, {transform_indices = @transform_4, window_bounds = array<i64: 1, 8, 32>}, {transform_indices = @transform_5, window_bounds = array<i64: 1, 4, 8, 8>}]} {
    %c0 = arith.constant 0 : index
    %c0_0 = arith.constant 0 : index
    %c0_1 = arith.constant 0 : index
    %c0_2 = arith.constant 0 : index
    %0 = vector.load %arg2[%c0, %c0_0, %c0_1, %c0_2] : memref<1x4x8x8xf32, #tpu.memory_space<vmem>>, vector<1x4x8x8xf32>
    %1 = vector.shape_cast %0 : vector<1x4x8x8xf32> to vector<4x8x8xf32>
    %c0_3 = arith.constant 0 : index
    %c0_4 = arith.constant 0 : index
    %c0_5 = arith.constant 0 : index
    %c0_6 = arith.constant 0 : index
    %2 = vector.load %arg3[%c0_3, %c0_4, %c0_5, %c0_6] : memref<1x4x8x8xf32, #tpu.memory_space<vmem>>, vector<1x4x8x8xf32>
    %3 = vector.shape_cast %2 : vector<1x4x8x8xf32> to vector<4x8x8xf32>
    %c0_7 = arith.constant 0 : index
    %c0_8 = arith.constant 0 : index
    %c0_9 = arith.constant 0 : index
    %c0_10 = arith.constant 0 : index
    %4 = vector.load %arg4[%c0_7, %c0_8, %c0_9, %c0_10] : memref<1x4x8x8xf32, #tpu.memory_space<vmem>>, vector<1x4x8x8xf32>
    %5 = vector.shape_cast %4 : vector<1x4x8x8xf32> to vector<4x8x8xf32>
    "tpu.trace_start"() <{level = 10 : i32, message = "hqd,hkd->hqk"}> : () -> ()
    %cst = arith.constant dense<0.000000e+00> : vector<4x8x8xf32>
    %6 = tpu.matmul %1, %3, %cst {dimension_numbers = #tpu.dot_dimension_numbers<[2], [2], [1], [1], [0, 0, 0, 1, 1, 1], [0], [0]>} : vector<4x8x8xf32>, vector<4x8x8xf32>, vector<4x8x8xf32> -> vector<4x8x8xf32>
    "tpu.trace_stop"() : () -> ()
    %cst_11 = arith.constant dense<0xFF800000> : vector<4x8xf32>
    %7 = vector.multi_reduction <maximumf>, %6, %cst_11 [2] : vector<4x8x8xf32> to vector<4x8xf32>
    %8 = vector.shape_cast %7 : vector<4x8xf32> to vector<4x8x1xf32>
    %9 = vector.broadcast %8 : vector<4x8x1xf32> to vector<4x8x8xf32>
    %10 = arith.subf %6, %9 : vector<4x8x8xf32>
    %11 = math.exp %10 : vector<4x8x8xf32>
    %cst_12 = arith.constant dense<0.000000e+00> : vector<4x8xf32>
    %12 = vector.multi_reduction <add>, %11, %cst_12 [2] : vector<4x8x8xf32> to vector<4x8xf32>
    %13 = vector.shape_cast %12 : vector<4x8xf32> to vector<4x8x1xf32>
    %14 = tpu.reciprocal %13 {approx = true} : vector<4x8x1xf32> -> vector<4x8x1xf32>
    %15 = vector.broadcast %14 : vector<4x8x1xf32> to vector<4x8x8xf32>
    %16 = arith.mulf %11, %15 : vector<4x8x8xf32>
    %c0_13 = arith.constant 0 : index
    %c0_14 = arith.constant 0 : index
    %c0_15 = arith.constant 0 : index
    %c0_16 = arith.constant 0 : index
    %17 = vector.load %arg7[%c0_13, %c0_14, %c0_15, %c0_16] : memref<1x4x8x8xf32, #tpu.memory_space<vmem>>, vector<1x4x8x8xf32>
    %18 = vector.shape_cast %17 : vector<1x4x8x8xf32> to vector<4x8x8xf32>
    %19 = vector.shape_cast %16 : vector<4x8x8xf32> to vector<1x4x8x8xf32>
    tpu.vector_store %arg7[%c0_13, %c0_14, %c0_15, %c0_16], %19 {strides = array<i32>} : memref<1x4x8x8xf32, #tpu.memory_space<vmem>>, vector<1x4x8x8xf32>,
    "tpu.trace_start"() <{level = 10 : i32, message = "hqk,hkd->hqd"}> : () -> ()
    %cst_17 = arith.constant dense<0.000000e+00> : vector<4x8x8xf32>
    %20 = tpu.matmul %16, %5, %cst_17 {dimension_numbers = #tpu.dot_dimension_numbers<[2], [1], [1], [2], [0, 0, 0, 1, 1, 2], [0], [0]>} : vector<4x8x8xf32>, vector<4x8x8xf32>, vector<4x8x8xf32> -> vector<4x8x8xf32>
    "tpu.trace_stop"() : () -> ()
    %21 = vector.extract_strided_slice %20 {offsets = [0, 0, 0], sizes = [1, 8, 8], strides = [1, 1, 1]} : vector<4x8x8xf32> to vector<1x8x8xf32>
    %22 = vector.shape_cast %21 : vector<1x8x8xf32> to vector<8x8xf32>
    %c0_18 = arith.constant 0 : index
    %c0_19 = arith.constant 0 : index
    %c0_20 = arith.constant 0 : index
    %23 = vector.load %arg5[%c0_18, %c0_19, %c0_20] : memref<4x8x32xf32, #tpu.memory_space<vmem>>, vector<1x8x32xf32>
    %24 = vector.shape_cast %23 : vector<1x8x32xf32> to vector<8x32xf32>
    %cst_21 = arith.constant dense<0.000000e+00> : vector<8x32xf32>
    %25 = tpu.matmul %22, %24, %cst_21 {dimension_numbers = #tpu.dot_dimension_numbers<[1], [0], [0], [1], [0, 0, 1, 1], [], []>} : vector<8x8xf32>, vector<8x32xf32>, vector<8x32xf32> -> vector<8x32xf32>
    %26 = vector.extract_strided_slice %20 {offsets = [1, 0, 0], sizes = [1, 8, 8], strides = [1, 1, 1]} : vector<4x8x8xf32> to vector<1x8x8xf32>
    %27 = vector.shape_cast %26 : vector<1x8x8xf32> to vector<8x8xf32>
    %c1 = arith.constant 1 : index
    %c0_22 = arith.constant 0 : index
    %c0_23 = arith.constant 0 : index
    %28 = vector.load %arg5[%c1, %c0_22, %c0_23] : memref<4x8x32xf32, #tpu.memory_space<vmem>>, vector<1x8x32xf32>
    %29 = vector.shape_cast %28 : vector<1x8x32xf32> to vector<8x32xf32>
    %cst_24 = arith.constant dense<0.000000e+00> : vector<8x32xf32>
    %30 = tpu.matmul %27, %29, %cst_24 {dimension_numbers = #tpu.dot_dimension_numbers<[1], [0], [0], [1], [0, 0, 1, 1], [], []>} : vector<8x8xf32>, vector<8x32xf32>, vector<8x32xf32> -> vector<8x32xf32>
    %31 = arith.addf %25, %30 : vector<8x32xf32>
    %32 = vector.extract_strided_slice %20 {offsets = [2, 0, 0], sizes = [1, 8, 8], strides = [1, 1, 1]} : vector<4x8x8xf32> to vector<1x8x8xf32>
    %33 = vector.shape_cast %32 : vector<1x8x8xf32> to vector<8x8xf32>
    %c2 = arith.constant 2 : index
    %c0_25 = arith.constant 0 : index
    %c0_26 = arith.constant 0 : index
    %34 = vector.load %arg5[%c2, %c0_25, %c0_26] : memref<4x8x32xf32, #tpu.memory_space<vmem>>, vector<1x8x32xf32>
    %35 = vector.shape_cast %34 : vector<1x8x32xf32> to vector<8x32xf32>
    %cst_27 = arith.constant dense<0.000000e+00> : vector<8x32xf32>
    %36 = tpu.matmul %33, %35, %cst_27 {dimension_numbers = #tpu.dot_dimension_numbers<[1], [0], [0], [1], [0, 0, 1, 1], [], []>} : vector<8x8xf32>, vector<8x32xf32>, vector<8x32xf32> -> vector<8x32xf32>
    %37 = arith.addf %31, %36 : vector<8x32xf32>
    %38 = vector.extract_strided_slice %20 {offsets = [3, 0, 0], sizes = [1, 8, 8], strides = [1, 1, 1]} : vector<4x8x8xf32> to vector<1x8x8xf32>
    %39 = vector.shape_cast %38 : vector<1x8x8xf32> to vector<8x8xf32>
    %c3 = arith.constant 3 : index
    %c0_28 = arith.constant 0 : index
    %c0_29 = arith.constant 0 : index
    %40 = vector.load %arg5[%c3, %c0_28, %c0_29] : memref<4x8x32xf32, #tpu.memory_space<vmem>>, vector<1x8x32xf32>
    %41 = vector.shape_cast %40 : vector<1x8x32xf32> to vector<8x32xf32>
    %cst_30 = arith.constant dense<0.000000e+00> : vector<8x32xf32>
    %42 = tpu.matmul %39, %41, %cst_30 {dimension_numbers = #tpu.dot_dimension_numbers<[1], [0], [0], [1], [0, 0, 1, 1], [], []>} : vector<8x8xf32>, vector<8x32xf32>, vector<8x32xf32> -> vector<8x32xf32>
    %43 = arith.addf %37, %42 : vector<8x32xf32>
    %c0_31 = arith.constant 0 : index
    %c0_32 = arith.constant 0 : index
    %c0_33 = arith.constant 0 : index
    %44 = vector.load %arg6[%c0_31, %c0_32, %c0_33] : memref<1x8x32xf32, #tpu.memory_space<vmem>>, vector<1x8x32xf32>
    %45 = vector.shape_cast %44 : vector<1x8x32xf32> to vector<8x32xf32>
    %46 = vector.shape_cast %43 : vector<8x32xf32> to vector<1x8x32xf32>
    tpu.vector_store %arg6[%c0_31, %c0_32, %c0_33], %46 {strides = array<i32>} : memref<1x8x32xf32, #tpu.memory_space<vmem>>, vector<1x8x32xf32>,
    return
  }
  func.func @transform_0(%arg0: i32, %arg1: i32) -> (i32, i32, i32, i32) {
    %c0_i32 = arith.constant 0 : i32
    %c0_i32_0 = arith.constant 0 : i32
    %c0_i32_1 = arith.constant 0 : i32
    return %arg0, %c0_i32, %arg1, %c0_i32_0 : i32, i32, i32, i32
  }
  func.func @transform_1(%arg0: i32, %arg1: i32) -> (i32, i32, i32, i32) {
    %c0_i32 = arith.constant 0 : i32
    %c0_i32_0 = arith.constant 0 : i32
    %c0_i32_1 = arith.constant 0 : i32
    %c0_i32_2 = arith.constant 0 : i32
    return %arg0, %c0_i32, %c0_i32_0, %c0_i32_1 : i32, i32, i32, i32
  }
  func.func @transform_2(%arg0: i32, %arg1: i32) -> (i32, i32, i32, i32) {
    %c0_i32 = arith.constant 0 : i32
    %c0_i32_0 = arith.constant 0 : i32
    %c0_i32_1 = arith.constant 0 : i32
    %c0_i32_2 = arith.constant 0 : i32
    return %arg0, %c0_i32, %c0_i32_0, %c0_i32_1 : i32, i32, i32, i32
  }
  func.func @transform_3(%arg0: i32, %arg1: i32) -> (i32, i32, i32) {
    %c0_i32 = arith.constant 0 : i32
    %c0_i32_0 = arith.constant 0 : i32
    %c0_i32_1 = arith.constant 0 : i32
    %c0_i32_2 = arith.constant 0 : i32
    return %c0_i32, %c0_i32_0, %c0_i32_1 : i32, i32, i32
  }
  func.func @transform_4(%arg0: i32, %arg1: i32) -> (i32, i32, i32) {
    %c0_i32 = arith.constant 0 : i32
    %c0_i32_0 = arith.constant 0 : i32
    return %arg0, %arg1, %c0_i32 : i32, i32, i32
  }
  func.func @transform_5(%arg0: i32, %arg1: i32) -> (i32, i32, i32, i32) {
    %c0_i32 = arith.constant 0 : i32
    %c0_i32_0 = arith.constant 0 : i32
    %c0_i32_1 = arith.constant 0 : i32
    return %arg0, %c0_i32, %arg1, %c0_i32_0 : i32, i32, i32, i32
  }
}

</mosaic_0001>

<llo_original>
// kernel: tpu_custom_call.1
$region0: #{tpu_custom_call.1}
  #allocation0 [shape = 'u32[]', space=smem, size = 0x4, offset = 0x4, fixed_abs, tag = 'smem constant byte address 0x4 - core index']
  #allocation1 [shape = 'u32[72,128]{1,0:T(1,128)}', space=vmem, size = 0x9000, scoped, tag = 'internal scratch']
  %s0 = inlined_call_operand.hbm [shape: f32[2,4,8,8], index: 0, kind: input, shape index: {}]
  %s1 = inlined_call_operand.hbm [shape: f32[2,4,8,8], index: 1, kind: input, shape index: {}]
  %s2 = inlined_call_operand.hbm [shape: f32[2,4,8,8], index: 2, kind: input, shape index: {}]
  %s3 = inlined_call_operand.hbm [shape: f32[4,8,32], index: 3, kind: input, shape index: {}]
  %s4 = inlined_call_operand.hbm [shape: f32[2,8,32], index: 4, kind: output, shape index: {0}]
  %s5 = inlined_call_operand.hbm [shape: f32[2,4,8,8], index: 5, kind: output, shape index: {1}]
  %6 = xla_tuple %s4, %s5
  %s7 = sld [smem:[#allocation0]]
  $region73: #{tpu_custom_call.1} parent=0
    _
  %s9 = ssub.s32 1, %s7
  %s10 = scalar_select 0, %s9, %s7
  $region1: #{tpu_custom_call.1} parent=0
    #allocation2 [shape = 'u8[32768]{0}', space=vmem, size = 0x8000, scoped, tag = 'input window, operand 0']
    #allocation3 [shape = 's32[2]{0}', space=sflag, size = 0x8, scoped, tag = 'scoped memory for tpu_custom_call.1']
    #allocation4 [shape = 's32[2]{0}', space=sflag, size = 0x8, scoped, tag = 'scoped memory for tpu_custom_call.1']
    #allocation5 [shape = 'u8[32768]{0}', space=vmem, size = 0x8000, scoped, tag = 'input window, operand 1']
    #allocation6 [shape = 's32[2]{0}', space=sflag, size = 0x8, scoped, tag = 'scoped memory for tpu_custom_call.1']
    #allocation7 [shape = 'u8[32768]{0}', space=vmem, size = 0x8000, scoped, tag = 'input window, operand 2']
    #allocation8 [shape = 'u8[16384]{0}', space=vmem, size = 0x4000, scoped, tag = 'input window, operand 3, single buffered']
    #allocation9 [shape = 's32[1]{0}', space=sflag, size = 0x4, scoped, tag = 'scoped memory for tpu_custom_call.1']
    #allocation10 [shape = 'u8[8192]{0}', space=vmem, size = 0x2000, scoped, tag = 'output window, operand 0']
    #allocation11 [shape = 'u8[32768]{0}', space=vmem, size = 0x8000, scoped, tag = 'output window, operand 1']
    #allocation12 [shape = 's32[2]{0}', space=sflag, size = 0x8, scoped, tag = 'scoped memory for tpu_custom_call.1']
    %11 = vsyncpa [#allocation3], 0
    %s12 = scalar_lea.sflag [#allocation3], 1
    %13 = vsyncpa %s12, 0
    %14 = vsyncpa [#allocation6], 0
    %s15 = scalar_lea.sflag [#allocation6], 1
    %16 = vsyncpa %s15, 0
    %17 = vsyncpa [#allocation9], 0
    %18 = vsyncpa [#allocation4], 0
    %s19 = scalar_lea.sflag [#allocation4], 1
    %20 = vsyncpa %s19, 0
    %21 = vsyncpa [#allocation12], 0
    %s22 = scalar_lea.sflag [#allocation12], 1
    %23 = vsyncpa %s22, 0
    loop: start=0, step=1, limit=4
    $region2: #{tpu_custom_call.1} parent=1 // loop_pre_header
      _
    $region3: #{tpu_custom_call.1} parent=1 // loop_header
      %s25 = sphi 0, %s29
      %p26 = scmp.ge.s32.totalorder %s25, 4
      %s32 = sphi 0, %s44
      %s33 = sphi 0, %s40
      %s34 = sphi 0, %s32
      %s35 = sphi 0, %s33
      %s36 = sphi 0, %s34
      %s37 = sphi 0, %s35
      %s49 = sphi 0, %s51
      %s52 = sphi 0, %s49
      %s53 = sphi 0, %s52
      %s69 = sphi 0, %s53
      %s75 = sphi 0, %s77
      %s78 = sphi 0, %s75
      %s79 = sphi 0, %s78
      %s95 = sphi 0, %s79
      %s101 = sphi 0, %s103
      %s104 = sphi 0, %s101
      %s105 = sphi 0, %s104
      %s121 = sphi 0, %s105
      %s125 = sphi 0, %s125
      %s127 = sphi 0, %s125
      %s128 = sphi 0, %s127
      %s142 = sphi 0, %s128
      %s150 = sphi 0, %s152
      %s153 = sphi 0, %s150
      %s154 = sphi 0, %s153
      %s170 = sphi 0, %s154
      %s178 = sphi 0, %s180
      %s181 = sphi 0, %s178
      %s182 = sphi 0, %s181
      %s198 = sphi 0, %s182
    $region4: #{tpu_custom_call.1} parent=1 // loop_header_branch
      %28 = sbr.rel (%p26) target = $region8
    $region5: #{tpu_custom_call.1} parent=1 // loop_body
      %s30 = ssub.s32 %s25, 1
      %s31 = ssub.s32 %s25, 2
      %s38 = sadd.s32 1, %s33
      %p39 = scmp.ge.s32.totalorder %s38, 1
      %s40 = scalar_select %p39, 0, %s38
      %s41 = sadd.s32 1, %s32
      %s42 = scalar_select %p39, %s41, %s32
      %p43 = scmp.ge.s32.totalorder %s42, 2
      %s44 = scalar_select %p43, 0, %s42
      %s45 = ssub.s32 %s32, %s44
      %s46 = ssub.s32 %s33, %s40
      %s47 = sor.u32 %s45, %s46
      %p48 = scmp.eq.s32.totalorder %s47, 0
      %s50 = sadd.s32 %s49, 1
      %s51 = scalar_select %p48, %s49, %s50
      %p54 = pneg %p48
      %p55 = scmp.eq.s32.totalorder %s25, 1
      %p56 = por %p54, %p55
      %p57 = scmp.ne.s32.totalorder %s49, %s52
      %p58 = scmp.eq.s32.totalorder %s25, 0
      %p59 = por %p57, %p58
      %p60 = scmp.ne.s32.totalorder %s49, %s52
      %p61 = scmp.eq.s32.totalorder %s30, 1
      %p62 = por %p60, %p61
      %p63 = scmp.ne.s32.totalorder %s52, %s53
      %p64 = scmp.eq.s32.totalorder %s30, 0
      %p65 = por %p63, %p64
      %p66 = scmp.ne.s32.totalorder %s52, %s53
      %p67 = scmp.eq.s32.totalorder %s31, 1
      %p68 = por %p66, %p67
      %p70 = scmp.ne.s32.totalorder %s53, %s69
      %p71 = scmp.eq.s32.totalorder %s31, 0
      %p72 = por %p70, %p71
      %s73 = ssub.s32 %s32, %s44
      %p74 = scmp.eq.s32.totalorder %s73, 0
      %s76 = sadd.s32 %s75, 1
      %s77 = scalar_select %p74, %s75, %s76
      %p80 = pneg %p74
      %p81 = scmp.eq.s32.totalorder %s25, 1
      %p82 = por %p80, %p81
      %p83 = scmp.ne.s32.totalorder %s75, %s78
      %p84 = scmp.eq.s32.totalorder %s25, 0
      %p85 = por %p83, %p84
      %p86 = scmp.ne.s32.totalorder %s75, %s78
      %p87 = scmp.eq.s32.totalorder %s30, 1
      %p88 = por %p86, %p87
      %p89 = scmp.ne.s32.totalorder %s78, %s79
      %p90 = scmp.eq.s32.totalorder %s30, 0
      %p91 = por %p89, %p90
      %p92 = scmp.ne.s32.totalorder %s78, %s79
      %p93 = scmp.eq.s32.totalorder %s31, 1
      %p94 = por %p92, %p93
      %p96 = scmp.ne.s32.totalorder %s79, %s95
      %p97 = scmp.eq.s32.totalorder %s31, 0
      %p98 = por %p96, %p97
      %s99 = ssub.s32 %s32, %s44
      %p100 = scmp.eq.s32.totalorder %s99, 0
      %s102 = sadd.s32 %s101, 1
      %s103 = scalar_select %p100, %s101, %s102
      %p106 = pneg %p100
      %p107 = scmp.eq.s32.totalorder %s25, 1
      %p108 = por %p106, %p107
      %p109 = scmp.ne.s32.totalorder %s101, %s104
      %p110 = scmp.eq.s32.totalorder %s25, 0
      %p111 = por %p109, %p110
      %p112 = scmp.ne.s32.totalorder %s101, %s104
      %p113 = scmp.eq.s32.totalorder %s30, 1
      %p114 = por %p112, %p113
      %p115 = scmp.ne.s32.totalorder %s104, %s105
      %p116 = scmp.eq.s32.totalorder %s30, 0
      %p117 = por %p115, %p116
      %p118 = scmp.ne.s32.totalorder %s104, %s105
      %p119 = scmp.eq.s32.totalorder %s31, 1
      %p120 = por %p118, %p119
      %p122 = scmp.ne.s32.totalorder %s105, %s121
      %p123 = scmp.eq.s32.totalorder %s31, 0
      %p124 = por %p122, %p123
      %s126 = sadd.s32 %s125, 1
      %p129 = scmp.eq.s32.totalorder %s25, 1
      %p130 = scmp.ne.s32.totalorder %s125, %s127
      %p131 = scmp.eq.s32.totalorder %s25, 0
      %p132 = por %p130, %p131
      %p133 = scmp.ne.s32.totalorder %s125, %s127
      %p134 = scmp.eq.s32.totalorder %s30, 1
      %p135 = por %p133, %p134
      %p136 = scmp.ne.s32.totalorder %s127, %s128
      %p137 = scmp.eq.s32.totalorder %s30, 0
      %p138 = por %p136, %p137
      %p139 = scmp.ne.s32.totalorder %s127, %s128
      %p140 = scmp.eq.s32.totalorder %s31, 1
      %p141 = por %p139, %p140
      %p143 = scmp.ne.s32.totalorder %s128, %s142
      %p144 = scmp.eq.s32.totalorder %s31, 0
      %p145 = por %p143, %p144
      %s146 = ssub.s32 %s32, %s44
      %s147 = ssub.s32 %s33, %s40
      %s148 = sor.u32 %s146, %s147
      %p149 = scmp.eq.s32.totalorder %s148, 0
      %s151 = sadd.s32 %s150, 1
      %s152 = scalar_select %p149, %s150, %s151
      %p155 = pneg %p149
      %p156 = scmp.eq.s32.totalorder %s25, 1
      %p157 = por %p155, %p156
      %p158 = scmp.ne.s32.totalorder %s150, %s153
      %p159 = scmp.eq.s32.totalorder %s25, 0
      %p160 = por %p158, %p159
      %p161 = scmp.ne.s32.totalorder %s150, %s153
      %p162 = scmp.eq.s32.totalorder %s30, 1
      %p163 = por %p161, %p162
      %p164 = scmp.ne.s32.totalorder %s153, %s154
      %p165 = scmp.eq.s32.totalorder %s30, 0
      %p166 = por %p164, %p165
      %p167 = scmp.ne.s32.totalorder %s153, %s154
      %p168 = scmp.eq.s32.totalorder %s31, 1
      %p169 = por %p167, %p168
      %p171 = scmp.ne.s32.totalorder %s154, %s170
      %p172 = scmp.eq.s32.totalorder %s31, 0
      %p173 = por %p171, %p172
      %s174 = ssub.s32 %s32, %s44
      %s175 = ssub.s32 %s33, %s40
      %s176 = sor.u32 %s174, %s175
      %p177 = scmp.eq.s32.totalorder %s176, 0
      %s179 = sadd.s32 %s178, 1
      %s180 = scalar_select %p177, %s178, %s179
      %p183 = pneg %p177
      %p184 = scmp.eq.s32.totalorder %s25, 1
      %p185 = por %p183, %p184
      %p186 = scmp.ne.s32.totalorder %s178, %s181
      %p187 = scmp.eq.s32.totalorder %s25, 0
      %p188 = por %p186, %p187
      %p189 = scmp.ne.s32.totalorder %s178, %s181
      %p190 = scmp.eq.s32.totalorder %s30, 1
      %p191 = por %p189, %p190
      %p192 = scmp.ne.s32.totalorder %s181, %s182
      %p193 = scmp.eq.s32.totalorder %s30, 0
      %p194 = por %p192, %p193
      %p195 = scmp.ne.s32.totalorder %s181, %s182
      %p196 = scmp.eq.s32.totalorder %s31, 1
      %p197 = por %p195, %p196
      %p199 = scmp.ne.s32.totalorder %s182, %s198
      %p200 = scmp.eq.s32.totalorder %s31, 0
      %p201 = por %p199, %p200
      %p202 = scmp.le.s32.totalorder 1, %s25
      %p203 = scmp.lt.s32.totalorder %s25, 3
      %p204 = pnand %p202, %p203
      %p205 = pneg %p204
      // Predicated region
      $region9: #{tpu_custom_call.1} parent=5 // pred_check
        _
      $region10: #{tpu_custom_call.1} parent=5 // pred_check_branch
        %207 = sbr.rel (%p204) target = $region12
      $region11: #{tpu_custom_call.1} parent=5 // pred_region
        %s208 = ssub.s32 %s25, 1
        // Predicated region
        $region13: #{tpu_custom_call.1} parent=11 // pred_check
          %p209 = pneg %p138
        $region14: #{tpu_custom_call.1} parent=11 // pred_check_branch
          %211 = sbr.rel (%p209) target = $region16
        $region15: #{tpu_custom_call.1} parent=11 // pred_region
          %213 = vsyncadd [#allocation9], 0
          %s214 = sshll.u32 %s3, 4
          %s215 = int_to_ptr.hbm [resolvable:$true] %s214
          %s216 = sshll.u32 [#allocation8], 4
          %s217 = int_to_ptr.vmem [resolvable:$true] %s216
          %222 = dma.hbm_to_vmem [thread:$0]  %s215, 512, %s217, [#allocation9], 128, 128, 8
        $region16: #{tpu_custom_call.1} parent=11 // pred_fallthru
          _
      $region12: #{tpu_custom_call.1} parent=5 // pred_fallthru
        _
      %p223 = scmp.lt.s32.totalorder %s25, 2
      // Predicated region
      $region17: #{tpu_custom_call.1} parent=5 // pred_check
        %p224 = pneg %p223
      $region18: #{tpu_custom_call.1} parent=5 // pred_check_branch
        %226 = sbr.rel (%p224) target = $region20
      $region19: #{tpu_custom_call.1} parent=5 // pred_region
        // Predicated region
        $region21: #{tpu_custom_call.1} parent=19 // pred_check
          %p227 = pneg %p59
        $region22: #{tpu_custom_call.1} parent=19 // pred_check_branch
          %229 = sbr.rel (%p227) target = $region24
        $region23: #{tpu_custom_call.1} parent=19 // pred_region
          %s230 = sand.u32 %s49, 1
          %s231 = scalar_lea.sflag [#allocation3], %s230
          %s232 = sand.u32 %s49, 1
          %s233 = smul.addr %s232, 32
          %s234 = scalar_lea.vmem [#allocation2], %s233
          %236 = vsyncadd %s231, 0
          %s237 = smul.addr %s32, 4
          %s238 = sadd.s32 %s33, %s237
          %s239 = smul.addr %s238, 8
          %s240 = scalar_lea.hbm %s0, %s239
          %s241 = sshll.u32 %s240, 4
          %s242 = int_to_ptr.hbm [resolvable:$true] %s241
          %s243 = sshll.u32 %s234, 4
          %s244 = int_to_ptr.vmem [resolvable:$true] %s243
          %249 = dma.hbm_to_vmem [thread:$0]  %s242, 512, %s244, %s231, 128, 128, 8
        $region24: #{tpu_custom_call.1} parent=19 // pred_fallthru
          _
        // Predicated region
        $region25: #{tpu_custom_call.1} parent=19 // pred_check
          %p250 = pneg %p85
        $region26: #{tpu_custom_call.1} parent=19 // pred_check_branch
          %252 = sbr.rel (%p250) target = $region28
        $region27: #{tpu_custom_call.1} parent=19 // pred_region
          %s253 = sand.u32 %s25, 1
          %s254 = scalar_lea.sflag [#allocation6], %s253
          %s255 = sand.u32 %s75, 1
          %s256 = smul.addr %s255, 32
          %s257 = scalar_lea.vmem [#allocation5], %s256
          %259 = vsyncadd %s254, 0
          %s260 = smul.addr %s32, 4
          %s261 = smul.addr %s260, 8
          %s262 = scalar_lea.hbm %s1, %s261
          %s263 = sshll.u32 %s262, 4
          %s264 = int_to_ptr.hbm [resolvable:$true] %s263
          %s265 = sshll.u32 %s257, 4
          %s266 = int_to_ptr.vmem [resolvable:$true] %s265
          %271 = dma.hbm_to_vmem [thread:$0]  %s264, 512, %s266, %s254, 128, 128, 8
        $region28: #{tpu_custom_call.1} parent=19 // pred_fallthru
          _
        // Predicated region
        $region29: #{tpu_custom_call.1} parent=19 // pred_check
          %p272 = pneg %p111
        $region30: #{tpu_custom_call.1} parent=19 // pred_check_branch
          %274 = sbr.rel (%p272) target = $region32
        $region31: #{tpu_custom_call.1} parent=19 // pred_region
          %s275 = sand.u32 %s25, 1
          %s276 = scalar_lea.sflag [#allocation6], %s275
          %s277 = sand.u32 %s101, 1
          %s278 = smul.addr %s277, 32
          %s279 = scalar_lea.vmem [#allocation7], %s278
          %281 = vsyncadd %s276, 0
          %s282 = smul.addr %s32, 4
          %s283 = smul.addr %s282, 8
          %s284 = scalar_lea.hbm %s2, %s283
          %s285 = sshll.u32 %s284, 4
          %s286 = int_to_ptr.hbm [resolvable:$true] %s285
          %s287 = sshll.u32 %s279, 4
          %s288 = int_to_ptr.vmem [resolvable:$true] %s287
          %293 = dma.hbm_to_vmem [thread:$0]  %s286, 512, %s288, %s276, 128, 128, 8
        $region32: #{tpu_custom_call.1} parent=19 // pred_fallthru
          _
      $region20: #{tpu_custom_call.1} parent=5 // pred_fallthru
        _
      %p294 = scmp.le.s32.totalorder 1, %s25
      %p295 = scmp.lt.s32.totalorder %s25, 3
      %p296 = pnand %p294, %p295
      %p297 = pneg %p296
      // Predicated region
      $region33: #{tpu_custom_call.1} parent=5 // pred_check
        _
      $region34: #{tpu_custom_call.1} parent=5 // pred_check_branch
        %299 = sbr.rel (%p296) target = $region36
      $region35: #{tpu_custom_call.1} parent=5 // pred_region
        %s300 = ssub.s32 %s25, 1
        %s301 = sand.u32 %s52, 1
        %s302 = scalar_lea.sflag [#allocation3], %s301
        %s303 = sand.u32 %s52, 1
        %s304 = smul.addr %s303, 32
        %s305 = scalar_lea.vmem [#allocation2], %s304
        // Predicated region
        $region37: #{tpu_custom_call.1} parent=35 // pred_check
          %p306 = pneg %p65
        $region38: #{tpu_custom_call.1} parent=35 // pred_check_branch
          %308 = sbr.rel (%p306) target = $region40
        $region39: #{tpu_custom_call.1} parent=35 // pred_region
          %310 = dma.done %s302, 512
        $region40: #{tpu_custom_call.1} parent=35 // pred_fallthru
          _
        %s311 = sand.u32 %s30, 1
        %s312 = scalar_lea.sflag [#allocation6], %s311
        %s313 = sand.u32 %s78, 1
        %s314 = smul.addr %s313, 32
        %s315 = scalar_lea.vmem [#allocation5], %s314
        // Predicated region
        $region41: #{tpu_custom_call.1} parent=35 // pred_check
          %p316 = pneg %p91
        $region42: #{tpu_custom_call.1} parent=35 // pred_check_branch
          %318 = sbr.rel (%p316) target = $region44
        $region43: #{tpu_custom_call.1} parent=35 // pred_region
          %320 = dma.done %s312, 512
        $region44: #{tpu_custom_call.1} parent=35 // pred_fallthru
          _
        %s321 = sand.u32 %s30, 1
        %s322 = scalar_lea.sflag [#allocation6], %s321
        %s323 = sand.u32 %s104, 1
        %s324 = smul.addr %s323, 32
        %s325 = scalar_lea.vmem [#allocation7], %s324
        // Predicated region
        $region45: #{tpu_custom_call.1} parent=35 // pred_check
          %p326 = pneg %p117
        $region46: #{tpu_custom_call.1} parent=35 // pred_check_branch
          %328 = sbr.rel (%p326) target = $region48
        $region47: #{tpu_custom_call.1} parent=35 // pred_region
          %330 = dma.done %s322, 512
        $region48: #{tpu_custom_call.1} parent=35 // pred_fallthru
          _
        // Predicated region
        $region49: #{tpu_custom_call.1} parent=35 // pred_check
          %p331 = pneg %p138
        $region50: #{tpu_custom_call.1} parent=35 // pred_check_branch
          %333 = sbr.rel (%p331) target = $region52
        $region51: #{tpu_custom_call.1} parent=35 // pred_region
          %335 = dma.done [#allocation9], 512
        $region52: #{tpu_custom_call.1} parent=35 // pred_fallthru
          _
        %s336 = sand.u32 %s52, 1
        %s337 = scalar_lea.sflag [#allocation3], %s336
        %s338 = sand.u32 %s52, 1
        %s339 = smul.addr %s338, 32
        %s340 = scalar_lea.vmem [#allocation2], %s339
        %p341 = pneg %p65
        %p342 = pneg %p62
        %s343 = sand.u32 %s30, 1
        %s344 = scalar_lea.sflag [#allocation6], %s343
        %s345 = sand.u32 %s78, 1
        %s346 = smul.addr %s345, 32
        %s347 = scalar_lea.vmem [#allocation5], %s346
        %p348 = pneg %p91
        %p349 = pneg %p88
        %s350 = sand.u32 %s30, 1
        %s351 = scalar_lea.sflag [#allocation6], %s350
        %s352 = sand.u32 %s104, 1
        %s353 = smul.addr %s352, 32
        %s354 = scalar_lea.vmem [#allocation7], %s353
        %p355 = pneg %p117
        %p356 = pneg %p114
        %p357 = pneg %p138
        %p358 = pneg %p135
        %p359 = pneg %p166
        %p360 = pneg %p163
        %s361 = sand.u32 %s153, 1
        %s362 = scalar_lea.sflag [#allocation4], %s361
        %s363 = sand.u32 %s153, 1
        %s364 = smul.addr %s363, 8
        %s365 = scalar_lea.vmem [#allocation10], %s364
        %p366 = pneg %p194
        %p367 = pneg %p191
        %s368 = sand.u32 %s181, 1
        %s369 = scalar_lea.sflag [#allocation12], %s368
        %s370 = sand.u32 %s181, 1
        %s371 = smul.addr %s370, 32
        %s372 = scalar_lea.vmem [#allocation11], %s371
        %v373 = vld [vmem:[%s305] sm:$0xff]
        %v374 = vld [vmem:[%s305 + $0x8] sm:$0xff]
        %v375 = vld [vmem:[%s305 + $0x10] sm:$0xff]
        %v376 = vld [vmem:[%s305 + $0x18] sm:$0xff]
        %v377 = vld [vmem:[%s315] sm:$0xff]
        %v378 = vld [vmem:[%s315 + $0x8] sm:$0xff]
        %v379 = vld [vmem:[%s315 + $0x10] sm:$0xff]
        %v380 = vld [vmem:[%s315 + $0x18] sm:$0xff]
        %v381 = vld [vmem:[%s325] sm:$0xff]
        %v382 = vld [vmem:[%s325 + $0x8] sm:$0xff]
        %v383 = vld [vmem:[%s325 + $0x10] sm:$0xff]
        %v384 = vld [vmem:[%s325 + $0x18] sm:$0xff]
        %vm385 = vcmask 64512
        %v387 = vsel %vm385, %v373, 0
        %v390 = vsel %vm385, %v377, 0
        %392 = vmatpush.xpose.msra.mxu0 0.0
        %393 = vmatpush.xpose.msra.mxu0 0.0
        %394 = vmatpush.xpose.msra.mxu0 0.0
        %395 = vmatpush.xpose.msra.mxu0 0.0
        %396 = vmatpush.xpose.msra.mxu0 0.0
        %397 = vmatpush.xpose.msra.mxu0 0.0
        %398 = vmatpush.xpose.msra.mxu0 0.0
        %399 = vmatpush.xpose.msra.mxu0 0.0
        %400 = vmatpush.xpose.msra.mxu0 0.0
        %401 = vmatpush.xpose.msra.mxu0 0.0
        %402 = vmatpush.xpose.msra.mxu0 0.0
        %403 = vmatpush.xpose.msra.mxu0 0.0
        %404 = vmatpush.xpose.msra.mxu0 0.0
        %405 = vmatpush.xpose.msra.mxu0 0.0
        %406 = vmatpush.xpose.msra.mxu0 0.0
        %407 = vmatpush.xpose.msra.mxu0 %v390
        %408 = vmatmul.f32.gmra.mxu0 %v387
        %v409 = vpop.f32.mrf.mxu0
        %v410 = vadd.f32 0.0, %v409
        %411 = vdwg.mxu0
        %v413 = vsel %vm385, %v374, 0
        %v416 = vsel %vm385, %v378, 0
        %418 = vmatpush.xpose.msra.mxu0 0.0
        %419 = vmatpush.xpose.msra.mxu0 0.0
        %420 = vmatpush.xpose.msra.mxu0 0.0
        %421 = vmatpush.xpose.msra.mxu0 0.0
        %422 = vmatpush.xpose.msra.mxu0 0.0
        %423 = vmatpush.xpose.msra.mxu0 0.0
        %424 = vmatpush.xpose.msra.mxu0 0.0
        %425 = vmatpush.xpose.msra.mxu0 0.0
        %426 = vmatpush.xpose.msra.mxu0 0.0
        %427 = vmatpush.xpose.msra.mxu0 0.0
        %428 = vmatpush.xpose.msra.mxu0 0.0
        %429 = vmatpush.xpose.msra.mxu0 0.0
        %430 = vmatpush.xpose.msra.mxu0 0.0
        %431 = vmatpush.xpose.msra.mxu0 0.0
        %432 = vmatpush.xpose.msra.mxu0 0.0
        %433 = vmatpush.xpose.msra.mxu0 %v416
        %434 = vmatmul.f32.gmra.mxu0 %v413
        %v435 = vpop.f32.mrf.mxu0
        %v436 = vadd.f32 0.0, %v435
        %437 = vdwg.mxu0
        %v439 = vsel %vm385, %v375, 0
        %v442 = vsel %vm385, %v379, 0
        %444 = vmatpush.xpose.msra.mxu0 0.0
        %445 = vmatpush.xpose.msra.mxu0 0.0
        %446 = vmatpush.xpose.msra.mxu0 0.0
        %447 = vmatpush.xpose.msra.mxu0 0.0
        %448 = vmatpush.xpose.msra.mxu0 0.0
        %449 = vmatpush.xpose.msra.mxu0 0.0
        %450 = vmatpush.xpose.msra.mxu0 0.0
        %451 = vmatpush.xpose.msra.mxu0 0.0
        %452 = vmatpush.xpose.msra.mxu0 0.0
        %453 = vmatpush.xpose.msra.mxu0 0.0
        %454 = vmatpush.xpose.msra.mxu0 0.0
        %455 = vmatpush.xpose.msra.mxu0 0.0
        %456 = vmatpush.xpose.msra.mxu0 0.0
        %457 = vmatpush.xpose.msra.mxu0 0.0
        %458 = vmatpush.xpose.msra.mxu0 0.0
        %459 = vmatpush.xpose.msra.mxu0 %v442
        %460 = vmatmul.f32.gmra.mxu0 %v439
        %v461 = vpop.f32.mrf.mxu0
        %v462 = vadd.f32 0.0, %v461
        %463 = vdwg.mxu0
        %v465 = vsel %vm385, %v376, 0
        %v468 = vsel %vm385, %v380, 0
        %470 = vmatpush.xpose.msra.mxu0 0.0
        %471 = vmatpush.xpose.msra.mxu0 0.0
        %472 = vmatpush.xpose.msra.mxu0 0.0
        %473 = vmatpush.xpose.msra.mxu0 0.0
        %474 = vmatpush.xpose.msra.mxu0 0.0
        %475 = vmatpush.xpose.msra.mxu0 0.0
        %476 = vmatpush.xpose.msra.mxu0 0.0
        %477 = vmatpush.xpose.msra.mxu0 0.0
        %478 = vmatpush.xpose.msra.mxu0 0.0
        %479 = vmatpush.xpose.msra.mxu0 0.0
        %480 = vmatpush.xpose.msra.mxu0 0.0
        %481 = vmatpush.xpose.msra.mxu0 0.0
        %482 = vmatpush.xpose.msra.mxu0 0.0
        %483 = vmatpush.xpose.msra.mxu0 0.0
        %484 = vmatpush.xpose.msra.mxu0 0.0
        %485 = vmatpush.xpose.msra.mxu0 %v468
        %486 = vmatmul.f32.gmra.mxu0 %v465
        %v487 = vpop.f32.mrf.mxu0
        %v488 = vadd.f32 0.0, %v487
        %489 = vdwg.mxu0
        %v490 = vsel %vm385, %v410, -inf
        %491 = vmax.xlane.f32.xlu0 %v490
        %v492 = vpop.xlane.xlu0 %491
        %v493 = vsel %vm385, %v436, -inf
        %494 = vmax.xlane.f32.xlu0 %v493
        %v495 = vpop.xlane.xlu0 %494
        %v496 = vsel %vm385, %v462, -inf
        %497 = vmax.xlane.f32.xlu0 %v496
        %v498 = vpop.xlane.xlu0 %497
        %v499 = vsel %vm385, %v488, -inf
        %500 = vmax.xlane.f32.xlu0 %v499
        %v501 = vpop.xlane.xlu0 %500
        %v502 = vsub.f32 %v410, %v492
        %v503 = vsub.f32 %v436, %v495
        %v504 = vsub.f32 %v462, %v498
        %v505 = vsub.f32 %v488, %v501
        %v506 = vmul.f32 %v502, 1.442695
        %v507 = vpow.pop %v506
        %v508 = vmul.f32 %v503, 1.442695
        %v509 = vpow.pop %v508
        %v510 = vmul.f32 %v504, 1.442695
        %v511 = vpow.pop %v510
        %v512 = vmul.f32 %v505, 1.442695
        %v513 = vpow.pop %v512
        %v514 = vsel %vm385, %v507, 0.0
        %515 = vadd.xlane.f32.xlu0 %v514
        %v516 = vpop.xlane.xlu0 %515
        %v517 = vsel %vm385, %v509, 0.0
        %518 = vadd.xlane.f32.xlu0 %v517
        %v519 = vpop.xlane.xlu0 %518
        %v520 = vsel %vm385, %v511, 0.0
        %521 = vadd.xlane.f32.xlu0 %v520
        %v522 = vpop.xlane.xlu0 %521
        %v523 = vsel %vm385, %v513, 0.0
        %524 = vadd.xlane.f32.xlu0 %v523
        %v525 = vpop.xlane.xlu0 %524
        %v526 = vrcp.pop %v516
        %v527 = vrcp.pop %v519
        %v528 = vrcp.pop %v522
        %v529 = vrcp.pop %v525
        %v530 = vmul.f32 %v507, %v526
        %v531 = vmul.f32 %v509, %v527
        %v532 = vmul.f32 %v511, %v528
        %v533 = vmul.f32 %v513, %v529
        %534 = vst.msk [vmem:[%s372] sm:$0xff] %vm385, %v530
        %535 = vst.msk [vmem:[%s372 + $0x8] sm:$0xff] %vm385, %v531
        %536 = vst.msk [vmem:[%s372 + $0x10] sm:$0xff] %vm385, %v532
        %537 = vst.msk [vmem:[%s372 + $0x18] sm:$0xff] %vm385, %v533
        %v539 = vsel %vm385, %v530, 0
        %541 = vmatpush.msra.mxu0 0.0
        %542 = vmatpush.msra.mxu0 0.0
        %543 = vmatpush.msra.mxu0 0.0
        %544 = vmatpush.msra.mxu0 0.0
        %545 = vmatpush.msra.mxu0 0.0
        %546 = vmatpush.msra.mxu0 0.0
        %547 = vmatpush.msra.mxu0 0.0
        %548 = vmatpush.msra.mxu0 0.0
        %549 = vmatpush.msra.mxu0 0.0
        %550 = vmatpush.msra.mxu0 0.0
        %551 = vmatpush.msra.mxu0 0.0
        %552 = vmatpush.msra.mxu0 0.0
        %553 = vmatpush.msra.mxu0 0.0
        %554 = vmatpush.msra.mxu0 0.0
        %555 = vmatpush.msra.mxu0 0.0
        %556 = vmatpush.msra.mxu0 %v381
        %557 = vmatmul.f32.gmra.mxu0 %v539
        %v558 = vpop.f32.mrf.mxu0
        %v559 = vadd.f32 0.0, %v558
        %560 = vdwg.mxu0
        %v562 = vsel %vm385, %v531, 0
        %564 = vmatpush.msra.mxu0 0.0
        %565 = vmatpush.msra.mxu0 0.0
        %566 = vmatpush.msra.mxu0 0.0
        %567 = vmatpush.msra.mxu0 0.0
        %568 = vmatpush.msra.mxu0 0.0
        %569 = vmatpush.msra.mxu0 0.0
        %570 = vmatpush.msra.mxu0 0.0
        %571 = vmatpush.msra.mxu0 0.0
        %572 = vmatpush.msra.mxu0 0.0
        %573 = vmatpush.msra.mxu0 0.0
        %574 = vmatpush.msra.mxu0 0.0
        %575 = vmatpush.msra.mxu0 0.0
        %576 = vmatpush.msra.mxu0 0.0
        %577 = vmatpush.msra.mxu0 0.0
        %578 = vmatpush.msra.mxu0 0.0
        %579 = vmatpush.msra.mxu0 %v382
        %580 = vmatmul.f32.gmra.mxu0 %v562
        %v581 = vpop.f32.mrf.mxu0
        %v582 = vadd.f32 0.0, %v581
        %583 = vdwg.mxu0
        %v585 = vsel %vm385, %v532, 0
        %587 = vmatpush.msra.mxu0 0.0
        %588 = vmatpush.msra.mxu0 0.0
        %589 = vmatpush.msra.mxu0 0.0
        %590 = vmatpush.msra.mxu0 0.0
        %591 = vmatpush.msra.mxu0 0.0
        %592 = vmatpush.msra.mxu0 0.0
        %593 = vmatpush.msra.mxu0 0.0
        %594 = vmatpush.msra.mxu0 0.0
        %595 = vmatpush.msra.mxu0 0.0
        %596 = vmatpush.msra.mxu0 0.0
        %597 = vmatpush.msra.mxu0 0.0
        %598 = vmatpush.msra.mxu0 0.0
        %599 = vmatpush.msra.mxu0 0.0
        %600 = vmatpush.msra.mxu0 0.0
        %601 = vmatpush.msra.mxu0 0.0
        %602 = vmatpush.msra.mxu0 %v383
        %603 = vmatmul.f32.gmra.mxu0 %v585
        %v604 = vpop.f32.mrf.mxu0
        %v605 = vadd.f32 0.0, %v604
        %606 = vdwg.mxu0
        %v608 = vsel %vm385, %v533, 0
        %610 = vmatpush.msra.mxu0 0.0
        %611 = vmatpush.msra.mxu0 0.0
        %612 = vmatpush.msra.mxu0 0.0
        %613 = vmatpush.msra.mxu0 0.0
        %614 = vmatpush.msra.mxu0 0.0
        %615 = vmatpush.msra.mxu0 0.0
        %616 = vmatpush.msra.mxu0 0.0
        %617 = vmatpush.msra.mxu0 0.0
        %618 = vmatpush.msra.mxu0 0.0
        %619 = vmatpush.msra.mxu0 0.0
        %620 = vmatpush.msra.mxu0 0.0
        %621 = vmatpush.msra.mxu0 0.0
        %622 = vmatpush.msra.mxu0 0.0
        %623 = vmatpush.msra.mxu0 0.0
        %624 = vmatpush.msra.mxu0 0.0
        %625 = vmatpush.msra.mxu0 %v384
        %626 = vmatmul.f32.gmra.mxu0 %v608
        %v627 = vpop.f32.mrf.mxu0
        %v628 = vadd.f32 0.0, %v627
        %629 = vdwg.mxu0
        %v630 = vld [vmem:[#allocation8] sm:$0xff]
        %s631 = scalar_lea.vmem [#allocation8], 8
        %v632 = vld [vmem:[%s631] sm:$0xff]
        %v634 = vsel %vm385, %v582, 0
        %636 = vmatpush.msra.mxu0 0.0
        %637 = vmatpush.msra.mxu0 0.0
        %638 = vmatpush.msra.mxu0 0.0
        %639 = vmatpush.msra.mxu0 0.0
        %640 = vmatpush.msra.mxu0 0.0
        %641 = vmatpush.msra.mxu0 0.0
        %642 = vmatpush.msra.mxu0 0.0
        %643 = vmatpush.msra.mxu0 0.0
        %644 = vmatpush.msra.mxu0 0.0
        %645 = vmatpush.msra.mxu0 0.0
        %646 = vmatpush.msra.mxu0 0.0
        %647 = vmatpush.msra.mxu0 0.0
        %648 = vmatpush.msra.mxu0 0.0
        %649 = vmatpush.msra.mxu0 0.0
        %650 = vmatpush.msra.mxu0 0.0
        %651 = vmatpush.msra.mxu0 %v632
        %652 = vmatmul.f32.gmra.mxu0 %v634
        %v653 = vpop.f32.mrf.mxu0
        %v654 = vadd.f32 0.0, %v653
        %655 = vdwg.mxu0
        %v657 = vsel %vm385, %v559, 0
        %659 = vmatpush.msra.mxu0 0.0
        %660 = vmatpush.msra.mxu0 0.0
        %661 = vmatpush.msra.mxu0 0.0
        %662 = vmatpush.msra.mxu0 0.0
        %663 = vmatpush.msra.mxu0 0.0
        %664 = vmatpush.msra.mxu0 0.0
        %665 = vmatpush.msra.mxu0 0.0
        %666 = vmatpush.msra.mxu0 0.0
        %667 = vmatpush.msra.mxu0 0.0
        %668 = vmatpush.msra.mxu0 0.0
        %669 = vmatpush.msra.mxu0 0.0
        %670 = vmatpush.msra.mxu0 0.0
        %671 = vmatpush.msra.mxu0 0.0
        %672 = vmatpush.msra.mxu0 0.0
        %673 = vmatpush.msra.mxu0 0.0
        %674 = vmatpush.msra.mxu0 %v630
        %675 = vmatmul.f32.gmra.mxu0 %v657
        %v676 = vpop.f32.mrf.mxu0
        %v677 = vadd.f32 %v654, %v676
        %678 = vdwg.mxu0
        %s679 = scalar_lea.vmem [#allocation8], 16
        %v680 = vld [vmem:[%s679] sm:$0xff]
        %v682 = vsel %vm385, %v605, 0
        %684 = vmatpush.msra.mxu0 0.0
        %685 = vmatpush.msra.mxu0 0.0
        %686 = vmatpush.msra.mxu0 0.0
        %687 = vmatpush.msra.mxu0 0.0
        %688 = vmatpush.msra.mxu0 0.0
        %689 = vmatpush.msra.mxu0 0.0
        %690 = vmatpush.msra.mxu0 0.0
        %691 = vmatpush.msra.mxu0 0.0
        %692 = vmatpush.msra.mxu0 0.0
        %693 = vmatpush.msra.mxu0 0.0
        %694 = vmatpush.msra.mxu0 0.0
        %695 = vmatpush.msra.mxu0 0.0
        %696 = vmatpush.msra.mxu0 0.0
        %697 = vmatpush.msra.mxu0 0.0
        %698 = vmatpush.msra.mxu0 0.0
        %699 = vmatpush.msra.mxu0 %v680
        %700 = vmatmul.f32.gmra.mxu0 %v682
        %v701 = vpop.f32.mrf.mxu0
        %v702 = vadd.f32 0.0, %v701
        %703 = vdwg.mxu0
        %v704 = vadd.f32 %v677, %v702
        %s705 = scalar_lea.vmem [#allocation8], 24
        %v706 = vld [vmem:[%s705] sm:$0xff]
        %v708 = vsel %vm385, %v628, 0
        %710 = vmatpush.msra.mxu0 0.0
        %711 = vmatpush.msra.mxu0 0.0
        %712 = vmatpush.msra.mxu0 0.0
        %713 = vmatpush.msra.mxu0 0.0
        %714 = vmatpush.msra.mxu0 0.0
        %715 = vmatpush.msra.mxu0 0.0
        %716 = vmatpush.msra.mxu0 0.0
        %717 = vmatpush.msra.mxu0 0.0
        %718 = vmatpush.msra.mxu0 0.0
        %719 = vmatpush.msra.mxu0 0.0
        %720 = vmatpush.msra.mxu0 0.0
        %721 = vmatpush.msra.mxu0 0.0
        %722 = vmatpush.msra.mxu0 0.0
        %723 = vmatpush.msra.mxu0 0.0
        %724 = vmatpush.msra.mxu0 0.0
        %725 = vmatpush.msra.mxu0 %v706
        %726 = vmatmul.f32.gmra.mxu0 %v708
        %v727 = vpop.f32.mrf.mxu0
        %v728 = vadd.f32 0.0, %v727
        %729 = vdwg.mxu0
        %v730 = vadd.f32 %v704, %v728
        %vm731 = vcmask 261120
        %732 = vst.msk [vmem:[%s365] sm:$0xff] %vm731, %v730
        %s733 = sand.u32 %s153, 1
        %s734 = scalar_lea.sflag [#allocation4], %s733
        %s735 = sand.u32 %s153, 1
        %s736 = smul.addr %s735, 8
        %s737 = scalar_lea.vmem [#allocation10], %s736
        %s738 = sand.u32 %s181, 1
        %s739 = scalar_lea.sflag [#allocation12], %s738
        %s740 = sand.u32 %s181, 1
        %s741 = smul.addr %s740, 32
        %s742 = scalar_lea.vmem [#allocation11], %s741
        // Predicated region
        $region53: #{tpu_custom_call.1} parent=35 // pred_check
          %p743 = pneg %p163
        $region54: #{tpu_custom_call.1} parent=35 // pred_check_branch
          %745 = sbr.rel (%p743) target = $region56
        $region55: #{tpu_custom_call.1} parent=35 // pred_region
          %747 = vsyncadd %s734, 0
          %s748 = sadd.s32 %s35, %s34
          %s749 = smul.addr %s748, 8
          %s750 = scalar_lea.hbm %s4, %s749
          %s752 = sshll.u32 %s737, 4
          %s753 = int_to_ptr.vmem [resolvable:$true] %s752
          %s754 = sshll.u32 %s750, 4
          %s755 = int_to_ptr.hbm [resolvable:$true] %s754
          %757 = dma.vmem_to_hbm [thread:$0]  %s753, 128, %s755, %s734
        $region56: #{tpu_custom_call.1} parent=35 // pred_fallthru
          _
        // Predicated region
        $region57: #{tpu_custom_call.1} parent=35 // pred_check
          %p758 = pneg %p191
        $region58: #{tpu_custom_call.1} parent=35 // pred_check_branch
          %760 = sbr.rel (%p758) target = $region60
        $region59: #{tpu_custom_call.1} parent=35 // pred_region
          %762 = vsyncadd %s739, 0
          %s763 = smul.addr %s34, 4
          %s764 = sadd.s32 %s35, %s763
          %s765 = smul.addr %s764, 8
          %s766 = scalar_lea.hbm %s5, %s765
          %s767 = sshll.u32 %s742, 4
          %s768 = int_to_ptr.vmem [resolvable:$true] %s767
          %s769 = sshll.u32 %s766, 4
          %s770 = int_to_ptr.hbm [resolvable:$true] %s769
          %775 = dma.vmem_to_hbm [thread:$0]  %s768, 512, %s770, %s739, 128, 128, 8
        $region60: #{tpu_custom_call.1} parent=35 // pred_fallthru
          _
      $region36: #{tpu_custom_call.1} parent=5 // pred_fallthru
        _
      %p776 = scmp.le.s32.totalorder 2, %s25
      // Predicated region
      $region61: #{tpu_custom_call.1} parent=5 // pred_check
        %p777 = pneg %p776
      $region62: #{tpu_custom_call.1} parent=5 // pred_check_branch
        %779 = sbr.rel (%p777) target = $region64
      $region63: #{tpu_custom_call.1} parent=5 // pred_region
        %s780 = ssub.s32 %s25, 2
        // Predicated region
        $region65: #{tpu_custom_call.1} parent=63 // pred_check
          %p781 = pneg %p169
        $region66: #{tpu_custom_call.1} parent=63 // pred_check_branch
          %783 = sbr.rel (%p781) target = $region68
        $region67: #{tpu_custom_call.1} parent=63 // pred_region
          %s784 = sand.u32 %s154, 1
          %s785 = scalar_lea.sflag [#allocation4], %s784
          %s786 = sand.u32 %s154, 1
          %s787 = smul.addr %s786, 8
          %s788 = scalar_lea.vmem [#allocation10], %s787
          %790 = dma.done %s785, 128
        $region68: #{tpu_custom_call.1} parent=63 // pred_fallthru
          _
        // Predicated region
        $region69: #{tpu_custom_call.1} parent=63 // pred_check
          %p791 = pneg %p197
        $region70: #{tpu_custom_call.1} parent=63 // pred_check_branch
          %793 = sbr.rel (%p791) target = $region72
        $region71: #{tpu_custom_call.1} parent=63 // pred_region
          %s794 = sand.u32 %s182, 1
          %s795 = scalar_lea.sflag [#allocation12], %s794
          %s796 = sand.u32 %s182, 1
          %s797 = smul.addr %s796, 32
          %s798 = scalar_lea.vmem [#allocation11], %s797
          %800 = dma.done %s795, 512
        $region72: #{tpu_custom_call.1} parent=63 // pred_fallthru
          _
      $region64: #{tpu_custom_call.1} parent=5 // pred_fallthru
        _
    $region6: #{tpu_custom_call.1} parent=1 // loop_footer
      %s29 = sadd.s32 1, %s25
    $region7: #{tpu_custom_call.1} parent=1 // loop_footer_branch
      %24 = sbr.rel target = $region3
    $region8: #{tpu_custom_call.1} parent=1 // loop_exit
      _
    %801 = vsyncpa [#allocation3], 1
    %s802 = scalar_lea.sflag [#allocation3], 1
    %803 = vsyncpa %s802, 1
    %804 = vsyncpa [#allocation6], 1
    %s805 = scalar_lea.sflag [#allocation6], 1
    %806 = vsyncpa %s805, 1
    %807 = vsyncpa [#allocation9], 1
    %808 = vsyncpa [#allocation4], 1
    %s809 = scalar_lea.sflag [#allocation4], 1
    %810 = vsyncpa %s809, 1
    %811 = vsyncpa [#allocation12], 1
    %s812 = scalar_lea.sflag [#allocation12], 1
    %813 = vsyncpa %s812, 1

</llo_original>
